<compile_context>
chip_gen: v6e
topology: v6e:2x2x1
jax: 0.10.0
libtpu: 0.0.40
codegen_flags: <defaults>
</compile_context>

<pallas_src>
import math

import jax
import jax.numpy as jnp
from jax.experimental import pallas as pl
from jax.experimental.pallas import tpu as pltpu


def _round_up(x, m):
    return ((x + m - 1) // m) * m


def _cdiv(a, b):
    return (a + b - 1) // b


def _vmem_limit_bytes():
    """Per-generation VMEM budget (v7x: 64 MiB physical; v5e/v6e: 128 MiB)."""
    cap = 64 * 1024 * 1024
    try:
        info = pltpu.get_tpu_info()
        cap = int(getattr(info, "vmem_capacity_bytes", cap) or cap)
    except Exception:
        pass
    return min((cap * 3) // 4, 100 * 1024 * 1024)


def _make_fused_kernel(k_total, tk, mask_k_tail, has_bias):
    """out[i,j] += adj[i,k] @ (x[k,:] @ W[:,j]) (+ bias[j] at last k)."""

    def kernel(*refs):
        if has_bias:
            adj_ref, x_ref, w_ref, bias_ref, o_ref = refs
        else:
            adj_ref, x_ref, w_ref, o_ref = refs

        kb = pl.program_id(2)

        @pl.when(kb == 0)
        def _():
            o_ref[...] = jnp.zeros_like(o_ref)

        a = adj_ref[...]
        if mask_k_tail:
            # Ragged last K-tile: out-of-bounds columns of adj hold undefined
            # data; zero them (x's padded rows are zero, so 0*0 == 0 exactly).
            col = jax.lax.broadcasted_iota(jnp.int32, a.shape, 1)
            a = jnp.where(col < (k_total - kb * tk), a, jnp.zeros_like(a))

        # support tile computed on the fly (tiny F_in inner dim, W resident).
        s = jnp.dot(x_ref[...], w_ref[...], preferred_element_type=jnp.float32)
        # Match adj's streaming dtype so a bf16 adjacency uses the bf16 MXU.
        o_ref[...] += jnp.dot(a, s.astype(a.dtype),
                              preferred_element_type=jnp.float32)

        if has_bias:
            @pl.when(kb == pl.num_programs(2) - 1)
            def _():
                o_ref[...] += bias_ref[...]

    return kernel


def gcn_forward(x, adj, weight, bias=None, *, tm=1024, tn=512, tk=2048):
    """GCN layer forward: adj @ (x @ weight) (+ bias).

    x:      [N, F_in]   node features
    adj:    [N, N]      dense (row-normalized) adjacency; may be f32 or bf16
    weight: [F_in, F_out]
    bias:   [F_out] or None
    returns [N, F_out] float32
    """
    n_nodes, f_in = x.shape
    M, K = adj.shape
    assert M == n_nodes and K == n_nodes, (adj.shape, x.shape)
    f_in_w, f_out = weight.shape
    assert f_in_w == f_in, (weight.shape, x.shape)

    adj_bytes = jnp.dtype(adj.dtype).itemsize
    x_bytes = jnp.dtype(x.dtype).itemsize
    w_bytes = jnp.dtype(weight.dtype).itemsize

    # ---- tile sizes -------------------------------------------------------
    sub = 16 if adj_bytes < 4 else 8            # sublane alignment (bf16: 16)
    tn_ = min(tn, _round_up(f_out, 128))
    f_out_p = _round_up(f_out, tn_)
    n_j = f_out_p // tn_

    tm_ = min(tm, _round_up(M, sub))
    tk_ = min(tk, _round_up(K, 128))

    # Megacore (v7x): make sure the parallel (i, j) axes expose >= 2 blocks.
    if _cdiv(M, tm_) * n_j < 2 and M > sub:
        tm_ = max(sub, _round_up(_cdiv(M, 2), sub))

    # Shrink K / M tiles until the double-buffered working set fits VMEM.
    vmem_limit = _vmem_limit_bytes()

    def _est(tm_e, tk_e):
        b = 2 * tm_e * tk_e * adj_bytes         # adj tiles (double-buffered)
        b += 2 * tk_e * f_in * x_bytes          # x tiles
        b += 2 * f_in * tn_ * w_bytes           # W tile
        b += 2 * tm_e * tn_ * 4                 # resident f32 output tile
        b += 2 * tn_ * 4                        # bias
        return b

    while _est(tm_, tk_) > (vmem_limit * 4) // 5 and tk_ > 512:
        tk_ = _round_up(tk_ // 2, 128)
    while _est(tm_, tk_) > (vmem_limit * 4) // 5 and tm_ > 256:
        tm_ = _round_up(tm_ // 2, sub)

    n_i = _cdiv(M, tm_)
    n_k = _cdiv(K, tk_)
    Mp = n_i * tm_
    Kp = n_k * tk_
    mask_k_tail = (K % tk_) != 0

    # ---- operand prep (adj is NEVER padded/copied: it is the O(N^2) stream)
    x_p = x if Kp == K else jnp.pad(x, ((0, Kp - K), (0, 0)))        # small
    w_p = (weight if f_out_p == f_out
           else jnp.pad(weight, ((0, 0), (0, f_out_p - f_out))))      # small

    in_specs = [
        pl.BlockSpec((tm_, tk_), lambda i, j, k: (i, k)),    # adj
        pl.BlockSpec((tk_, f_in), lambda i, j, k: (k, 0)),   # x
        pl.BlockSpec((f_in, tn_), lambda i, j, k: (0, j)),   # W (resident)
    ]
    operands = [adj, x_p, w_p]

    has_bias = bias is not None
    if has_bias:
        b2d = bias.astype(jnp.float32).reshape(1, f_out)
        if f_out_p != f_out:
            b2d = jnp.pad(b2d, ((0, 0), (0, f_out_p - f_out)))
        in_specs.append(pl.BlockSpec((1, tn_), lambda i, j, k: (0, j)))
        operands.append(b2d)

    kernel = _make_fused_kernel(K, tk_, mask_k_tail, has_bias)

    cost = pl.CostEstimate(
        flops=2 * Mp * Kp * f_out_p + 2 * n_i * Kp * f_in * f_out_p,
        transcendentals=0,
        bytes_accessed=(M * K * adj_bytes + n_i * n_j * Kp * f_in * x_bytes
                        + Mp * f_out_p * 4 + f_in * f_out_p * w_bytes),
    )

    out_p = pl.pallas_call(
        kernel,
        out_shape=jax.ShapeDtypeStruct((Mp, f_out_p), jnp.float32),
        grid_spec=pltpu.PrefetchScalarGridSpec(
            num_scalar_prefetch=0,
            grid=(n_i, n_j, n_k),
            in_specs=in_specs,
            out_specs=pl.BlockSpec((tm_, tn_), lambda i, j, k: (i, j)),
        ),
        compiler_params=pltpu.CompilerParams(
            dimension_semantics=("parallel", "parallel", "arbitrary"),
            vmem_limit_bytes=vmem_limit,
        ),
        cost_estimate=cost,
    )(*operands)

    if (Mp, f_out_p) != (M, f_out):
        out_p = out_p[:M, :f_out]
    return out_p


if __name__ == "__main__":
    # Small, TPU-friendly shapes consistent with the module.
    N = 64          # number of graph nodes
    F_IN = 32       # in_features
    F_OUT = 128     # out_features

    key = jax.random.PRNGKey(0)
    k_x, k_adj, k_w, k_b = jax.random.split(key, 4)

    # Deterministic parameter init mirroring reset_parameters():
    # uniform(-stdv, stdv) with stdv = 1/sqrt(out_features)
    stdv = 1.0 / math.sqrt(F_OUT)
    weight = jax.random.uniform(k_w, (F_IN, F_OUT), jnp.float32, -stdv, stdv)
    bias = jax.random.uniform(k_b, (F_OUT,), jnp.float32, -stdv, stdv)

    # Example inputs: node features and a (dense) row-normalized adjacency.
    x = jax.random.normal(k_x, (N, F_IN), jnp.float32)
    adj_raw = (jax.random.uniform(k_adj, (N, N), jnp.float32) < 0.1).astype(jnp.float32)
    adj_raw = adj_raw + jnp.eye(N, dtype=jnp.float32)           # add self loops
    adj = adj_raw / jnp.sum(adj_raw, axis=1, keepdims=True)     # row-normalize

    # Reference (plain JAX) of the PyTorch forward.
    ref = adj @ (x @ weight) + bias
    ref_nobias = adj @ (x @ weight)

    # 1) f32 adjacency, with bias.
    out = jax.block_until_ready(gcn_forward(x, adj, weight, bias))
    assert out.shape == (N, F_OUT)
    assert jnp.allclose(out, ref, atol=1e-4, rtol=1e-4)

    # 2) f32 adjacency, bias=None kernel variant.
    out_nobias = jax.block_until_ready(gcn_forward(x, adj, weight, None))
    assert jnp.allclose(out_nobias, ref_nobias, atol=1e-4, rtol=1e-4)

    # 3) bf16-streamed adjacency (halves the dominant O(N^2) HBM stream;
    #    f32 accumulation kept) -- loosened tolerance per numerics tradeoff.
    out_bf16 = jax.block_until_ready(
        gcn_forward(x, adj.astype(jnp.bfloat16), weight, bias))
    assert jnp.allclose(out_bf16, ref, atol=2e-2, rtol=2e-2)

    print("KERNEL_OK")
</pallas_src>

<mosaic_0001>
module attributes {stable_mosaic.version = 11 : i64} {
  func.func @kernel(%arg0: i32, %arg1: i32, %arg2: i32, %arg3: memref<32x128xf32, #tpu.memory_space<vmem>>, %arg4: memref<128x32xf32, #tpu.memory_space<vmem>>, %arg5: memref<32x128xf32, #tpu.memory_space<vmem>>, %arg6: memref<1x128xf32, #tpu.memory_space<vmem>>, %arg7: memref<32x128xf32, #tpu.memory_space<vmem>>) attributes {dimension_semantics = [#tpu.dimension_semantics<parallel>, #tpu.dimension_semantics<parallel>, #tpu.dimension_semantics<arbitrary>], iteration_bounds = array<i64: 2, 1, 1>, scalar_prefetch = 0 : i64, scratch_operands = 0 : i64, tpu.core_type = #tpu.core_type<tc>, window_params = [{transform_indices = @transform_0, window_bounds = array<i64: 32, 128>}, {transform_indices = @transform_1, window_bounds = array<i64: 128, 32>}, {transform_indices = @transform_2, window_bounds = array<i64: 32, 128>}, {transform_indices = @transform_3, window_bounds = array<i64: 1, 128>}, {transform_indices = @transform_4, window_bounds = array<i64: 32, 128>}]} {
    %c0_i32 = arith.constant 0 : i32
    %0 = arith.cmpi eq, %arg2, %c0_i32 : i32
    %1 = arith.extui %0 : i1 to i32
    %c0_i32_0 = arith.constant 0 : i32
    %2 = arith.cmpi ne, %1, %c0_i32_0 : i32
    scf.if %2 {
      %cst_14 = arith.constant 0.000000e+00 : f32
      %21 = vector.broadcast %cst_14 : f32 to vector<32x128xf32>
      %c0_15 = arith.constant 0 : index
      %c0_16 = arith.constant 0 : index
      %22 = vector.load %arg7[%c0_15, %c0_16] : memref<32x128xf32, #tpu.memory_space<vmem>>, vector<32x128xf32>
      tpu.vector_store %arg7[%c0_15, %c0_16], %21 {strides = array<i32>} : memref<32x128xf32, #tpu.memory_space<vmem>>, vector<32x128xf32>,
    } else {
    }
    %c0 = arith.constant 0 : index
    %c0_1 = arith.constant 0 : index
    %3 = vector.load %arg3[%c0, %c0_1] : memref<32x128xf32, #tpu.memory_space<vmem>>, vector<32x128xf32>
    %4 = tpu.iota {dimensions = array<i32: 1>} : vector<32x128xi32>
    %c128_i32 = arith.constant 128 : i32
    %5 = arith.muli %arg2, %c128_i32 : i32
    %c64_i32 = arith.constant 64 : i32
    %6 = arith.subi %c64_i32, %5 : i32
    %7 = vector.broadcast %6 : i32 to vector<32x128xi32>
    %8 = arith.cmpi slt, %4, %7 : vector<32x128xi32>
    %cst = arith.constant 0.000000e+00 : f32
    %9 = vector.broadcast %cst : f32 to vector<32x128xf32>
    %10 = arith.select %8, %3, %9 : vector<32x128xi1>, vector<32x128xf32>
    %c0_2 = arith.constant 0 : index
    %c0_3 = arith.constant 0 : index
    %11 = vector.load %arg4[%c0_2, %c0_3] : memref<128x32xf32, #tpu.memory_space<vmem>>, vector<128x32xf32>
    %c0_4 = arith.constant 0 : index
    %c0_5 = arith.constant 0 : index
    %12 = vector.load %arg5[%c0_4, %c0_5] : memref<32x128xf32, #tpu.memory_space<vmem>>, vector<32x128xf32>
    %cst_6 = arith.constant dense<0.000000e+00> : vector<128x128xf32>
    %13 = tpu.matmul %11, %12, %cst_6 {dimension_numbers = #tpu.dot_dimension_numbers<[1], [0], [0], [1], [0, 0, 1, 1], [], []>} : vector<128x32xf32>, vector<32x128xf32>, vector<128x128xf32> -> vector<128x128xf32>
    %c0_7 = arith.constant 0 : index
    %c0_8 = arith.constant 0 : index
    %14 = vector.load %arg7[%c0_7, %c0_8] : memref<32x128xf32, #tpu.memory_space<vmem>>, vector<32x128xf32>
    %cst_9 = arith.constant dense<0.000000e+00> : vector<32x128xf32>
    %15 = tpu.matmul %10, %13, %cst_9 {dimension_numbers = #tpu.dot_dimension_numbers<[1], [0], [0], [1], [0, 0, 1, 1], [], []>} : vector<32x128xf32>, vector<128x128xf32>, vector<32x128xf32> -> vector<32x128xf32>
    %16 = arith.addf %14, %15 : vector<32x128xf32>
    %c0_10 = arith.constant 0 : index
    %c0_11 = arith.constant 0 : index
    %17 = vector.load %arg7[%c0_10, %c0_11] : memref<32x128xf32, #tpu.memory_space<vmem>>, vector<32x128xf32>
    tpu.vector_store %arg7[%c0_10, %c0_11], %16 {strides = array<i32>} : memref<32x128xf32, #tpu.memory_space<vmem>>, vector<32x128xf32>,
    %c0_i32_12 = arith.constant 0 : i32
    %18 = arith.cmpi eq, %arg2, %c0_i32_12 : i32
    %19 = arith.extui %18 : i1 to i32
    %c0_i32_13 = arith.constant 0 : i32
    %20 = arith.cmpi ne, %19, %c0_i32_13 : i32
    scf.if %20 {
      %c0_14 = arith.constant 0 : index
      %c0_15 = arith.constant 0 : index
      %21 = vector.load %arg7[%c0_14, %c0_15] : memref<32x128xf32, #tpu.memory_space<vmem>>, vector<32x128xf32>
      %c0_16 = arith.constant 0 : index
      %c0_17 = arith.constant 0 : index
      %22 = vector.load %arg6[%c0_16, %c0_17] : memref<1x128xf32, #tpu.memory_space<vmem>>, vector<1x128xf32>
      %23 = vector.broadcast %22 : vector<1x128xf32> to vector<32x128xf32>
      %24 = arith.addf %21, %23 : vector<32x128xf32>
      %c0_18 = arith.constant 0 : index
      %c0_19 = arith.constant 0 : index
      %25 = vector.load %arg7[%c0_18, %c0_19] : memref<32x128xf32, #tpu.memory_space<vmem>>, vector<32x128xf32>
      tpu.vector_store %arg7[%c0_18, %c0_19], %24 {strides = array<i32>} : memref<32x128xf32, #tpu.memory_space<vmem>>, vector<32x128xf32>,
    } else {
    }
    return
  }
  func.func @transform_0(%arg0: i32, %arg1: i32, %arg2: i32) -> (i32, i32) {
    %c0_i32 = arith.constant 0 : i32
    return %arg0, %arg2 : i32, i32
  }
  func.func @transform_1(%arg0: i32, %arg1: i32, %arg2: i32) -> (i32, i32) {
    %c0_i32 = arith.constant 0 : i32
    %c0_i32_0 = arith.constant 0 : i32
    return %arg2, %c0_i32 : i32, i32
  }
  func.func @transform_2(%arg0: i32, %arg1: i32, %arg2: i32) -> (i32, i32) {
    %c0_i32 = arith.constant 0 : i32
    %c0_i32_0 = arith.constant 0 : i32
    return %c0_i32, %arg1 : i32, i32
  }
  func.func @transform_3(%arg0: i32, %arg1: i32, %arg2: i32) -> (i32, i32) {
    %c0_i32 = arith.constant 0 : i32
    %c0_i32_0 = arith.constant 0 : i32
    return %c0_i32, %arg1 : i32, i32
  }
  func.func @transform_4(%arg0: i32, %arg1: i32, %arg2: i32) -> (i32, i32) {
    %c0_i32 = arith.constant 0 : i32
    return %arg0, %arg1 : i32, i32
  }
}

</mosaic_0001>

<llo_original>
// kernel: tpu_custom_call.1
$region0: #{tpu_custom_call.1}
  #allocation0 [shape = 'u32[]', space=smem, size = 0x4, offset = 0x4, fixed_abs, tag = 'smem constant byte address 0x4 - core index']
  #allocation1 [shape = 'u32[144,128]{1,0:T(1,128)}', space=vmem, size = 0x12000, scoped, tag = 'internal scratch']
  %s0 = inlined_call_operand.vmem [shape: f32[64,64], index: 0, kind: input, shape index: {}]
  %s1 = inlined_call_operand.vmem [shape: f32[128,32], index: 1, kind: input, shape index: {}]
  %s2 = inlined_call_operand.vmem [shape: f32[32,128], index: 2, kind: input, shape index: {}]
  %s3 = inlined_call_operand.vmem [shape: f32[1,128], index: 3, kind: input, shape index: {}]
  %s4 = inlined_call_operand.hbm [shape: f32[64,128], index: 4, kind: output, shape index: {}]
  %s5 = sld [smem:[#allocation0]]
  $region57: #{tpu_custom_call.1} parent=0
    _
  %s7 = ssub.s32 1, %s5
  %s8 = scalar_select 0, %s7, %s5
  $region1: #{tpu_custom_call.1} parent=0
    #allocation2 [shape = 'u8[32768]{0}', space=vmem, size = 0x8000, scoped, tag = 'output window, operand 0']
    #allocation3 [shape = 's32[2]{0}', space=sflag, size = 0x8, scoped, tag = 'scoped memory for tpu_custom_call.1']
    %9 = vsyncpa [#allocation3], 0
    %s10 = scalar_lea.sflag [#allocation3], 1
    %11 = vsyncpa %s10, 0
    loop: start=0, step=1, limit=4
    $region2: #{tpu_custom_call.1} parent=1 // loop_pre_header
      _
    $region3: #{tpu_custom_call.1} parent=1 // loop_header
      %s13 = sphi 0, %s17
      %p14 = scmp.ge.s32.totalorder %s13, 4
      %s20 = sphi 0, %s39
      %s21 = sphi 0, %s35
      %s22 = sphi 0, %s31
      %s23 = sphi 0, %s20
      %s24 = sphi 0, %s21
      %s25 = sphi 0, %s22
      %s26 = sphi 0, %s23
      %s27 = sphi 0, %s24
      %s28 = sphi 0, %s25
      %s44 = sphi 0, %s46
      %s47 = sphi 0, %s44
      %s48 = sphi 0, %s47
      %s64 = sphi 0, %s48
      %s70 = sphi 0, %s72
      %s73 = sphi 0, %s70
      %s74 = sphi 0, %s73
      %s90 = sphi 0, %s74
      %s96 = sphi 0, %s98
      %s99 = sphi 0, %s96
      %s100 = sphi 0, %s99
      %s116 = sphi 0, %s100
      %s122 = sphi 0, %s124
      %s125 = sphi 0, %s122
      %s126 = sphi 0, %s125
      %s142 = sphi 0, %s126
      %s150 = sphi 0, %s152
      %s153 = sphi 0, %s150
      %s154 = sphi 0, %s153
      %s170 = sphi 0, %s154
    $region4: #{tpu_custom_call.1} parent=1 // loop_header_branch
      %16 = sbr.rel (%p14) target = $region8
    $region5: #{tpu_custom_call.1} parent=1 // loop_body
      %s18 = ssub.s32 %s13, 1
      %s19 = ssub.s32 %s13, 2
      %s29 = sadd.s32 1, %s22
      %p30 = scmp.ge.s32.totalorder %s29, 1
      %s31 = scalar_select %p30, 0, %s29
      %s32 = sadd.s32 1, %s21
      %s33 = scalar_select %p30, %s32, %s21
      %p34 = scmp.ge.s32.totalorder %s33, 1
      %s35 = scalar_select %p34, 0, %s33
      %s36 = sadd.s32 1, %s20
      %s37 = scalar_select %p34, %s36, %s20
      %p38 = scmp.ge.s32.totalorder %s37, 2
      %s39 = scalar_select %p38, 0, %s37
      %s40 = ssub.s32 %s20, %s39
      %s41 = ssub.s32 %s22, %s31
      %s42 = sor.u32 %s40, %s41
      %p43 = scmp.eq.s32.totalorder %s42, 0
      %s45 = sadd.s32 %s44, 1
      %s46 = scalar_select %p43, %s44, %s45
      %p49 = pneg %p43
      %p50 = scmp.eq.s32.totalorder %s13, 1
      %p51 = por %p49, %p50
      %p52 = scmp.ne.s32.totalorder %s44, %s47
      %p53 = scmp.eq.s32.totalorder %s13, 0
      %p54 = por %p52, %p53
      %p55 = scmp.ne.s32.totalorder %s44, %s47
      %p56 = scmp.eq.s32.totalorder %s18, 1
      %p57 = por %p55, %p56
      %p58 = scmp.ne.s32.totalorder %s47, %s48
      %p59 = scmp.eq.s32.totalorder %s18, 0
      %p60 = por %p58, %p59
      %p61 = scmp.ne.s32.totalorder %s47, %s48
      %p62 = scmp.eq.s32.totalorder %s19, 1
      %p63 = por %p61, %p62
      %p65 = scmp.ne.s32.totalorder %s48, %s64
      %p66 = scmp.eq.s32.totalorder %s19, 0
      %p67 = por %p65, %p66
      %s68 = ssub.s32 %s22, %s31
      %p69 = scmp.eq.s32.totalorder %s68, 0
      %s71 = sadd.s32 %s70, 1
      %s72 = scalar_select %p69, %s70, %s71
      %p75 = pneg %p69
      %p76 = scmp.eq.s32.totalorder %s13, 1
      %p77 = por %p75, %p76
      %p78 = scmp.ne.s32.totalorder %s70, %s73
      %p79 = scmp.eq.s32.totalorder %s13, 0
      %p80 = por %p78, %p79
      %p81 = scmp.ne.s32.totalorder %s70, %s73
      %p82 = scmp.eq.s32.totalorder %s18, 1
      %p83 = por %p81, %p82
      %p84 = scmp.ne.s32.totalorder %s73, %s74
      %p85 = scmp.eq.s32.totalorder %s18, 0
      %p86 = por %p84, %p85
      %p87 = scmp.ne.s32.totalorder %s73, %s74
      %p88 = scmp.eq.s32.totalorder %s19, 1
      %p89 = por %p87, %p88
      %p91 = scmp.ne.s32.totalorder %s74, %s90
      %p92 = scmp.eq.s32.totalorder %s19, 0
      %p93 = por %p91, %p92
      %s94 = ssub.s32 %s21, %s35
      %p95 = scmp.eq.s32.totalorder %s94, 0
      %s97 = sadd.s32 %s96, 1
      %s98 = scalar_select %p95, %s96, %s97
      %p101 = pneg %p95
      %p102 = scmp.eq.s32.totalorder %s13, 1
      %p103 = por %p101, %p102
      %p104 = scmp.ne.s32.totalorder %s96, %s99
      %p105 = scmp.eq.s32.totalorder %s13, 0
      %p106 = por %p104, %p105
      %p107 = scmp.ne.s32.totalorder %s96, %s99
      %p108 = scmp.eq.s32.totalorder %s18, 1
      %p109 = por %p107, %p108
      %p110 = scmp.ne.s32.totalorder %s99, %s100
      %p111 = scmp.eq.s32.totalorder %s18, 0
      %p112 = por %p110, %p111
      %p113 = scmp.ne.s32.totalorder %s99, %s100
      %p114 = scmp.eq.s32.totalorder %s19, 1
      %p115 = por %p113, %p114
      %p117 = scmp.ne.s32.totalorder %s100, %s116
      %p118 = scmp.eq.s32.totalorder %s19, 0
      %p119 = por %p117, %p118
      %s120 = ssub.s32 %s21, %s35
      %p121 = scmp.eq.s32.totalorder %s120, 0
      %s123 = sadd.s32 %s122, 1
      %s124 = scalar_select %p121, %s122, %s123
      %p127 = pneg %p121
      %p128 = scmp.eq.s32.totalorder %s13, 1
      %p129 = por %p127, %p128
      %p130 = scmp.ne.s32.totalorder %s122, %s125
      %p131 = scmp.eq.s32.totalorder %s13, 0
      %p132 = por %p130, %p131
      %p133 = scmp.ne.s32.totalorder %s122, %s125
      %p134 = scmp.eq.s32.totalorder %s18, 1
      %p135 = por %p133, %p134
      %p136 = scmp.ne.s32.totalorder %s125, %s126
      %p137 = scmp.eq.s32.totalorder %s18, 0
      %p138 = por %p136, %p137
      %p139 = scmp.ne.s32.totalorder %s125, %s126
      %p140 = scmp.eq.s32.totalorder %s19, 1
      %p141 = por %p139, %p140
      %p143 = scmp.ne.s32.totalorder %s126, %s142
      %p144 = scmp.eq.s32.totalorder %s19, 0
      %p145 = por %p143, %p144
      %s146 = ssub.s32 %s20, %s39
      %s147 = ssub.s32 %s21, %s35
      %s148 = sor.u32 %s146, %s147
      %p149 = scmp.eq.s32.totalorder %s148, 0
      %s151 = sadd.s32 %s150, 1
      %s152 = scalar_select %p149, %s150, %s151
      %p155 = pneg %p149
      %p156 = scmp.eq.s32.totalorder %s13, 1
      %p157 = por %p155, %p156
      %p158 = scmp.ne.s32.totalorder %s150, %s153
      %p159 = scmp.eq.s32.totalorder %s13, 0
      %p160 = por %p158, %p159
      %p161 = scmp.ne.s32.totalorder %s150, %s153
      %p162 = scmp.eq.s32.totalorder %s18, 1
      %p163 = por %p161, %p162
      %p164 = scmp.ne.s32.totalorder %s153, %s154
      %p165 = scmp.eq.s32.totalorder %s18, 0
      %p166 = por %p164, %p165
      %p167 = scmp.ne.s32.totalorder %s153, %s154
      %p168 = scmp.eq.s32.totalorder %s19, 1
      %p169 = por %p167, %p168
      %p171 = scmp.ne.s32.totalorder %s154, %s170
      %p172 = scmp.eq.s32.totalorder %s19, 0
      %p173 = por %p171, %p172
      %p174 = scmp.le.s32.totalorder 1, %s13
      %p175 = scmp.lt.s32.totalorder %s13, 3
      %p176 = pnand %p174, %p175
      %p177 = pneg %p176
      // Predicated region
      $region9: #{tpu_custom_call.1} parent=5 // pred_check
        _
      $region10: #{tpu_custom_call.1} parent=5 // pred_check_branch
        %179 = sbr.rel (%p176) target = $region12
      $region11: #{tpu_custom_call.1} parent=5 // pred_region
        %s180 = ssub.s32 %s13, 1
        // Predicated region
        $region13: #{tpu_custom_call.1} parent=11 // pred_check
          %p181 = pneg %p86
        $region14: #{tpu_custom_call.1} parent=11 // pred_check_branch
          %183 = sbr.rel (%p181) target = $region16
        $region15: #{tpu_custom_call.1} parent=11 // pred_region
          %s184 = smul.u32 16, %s25
          %p185 = scmp.lt.s32.totalorder %s184, 15
          %s186 = scalar_select %p185, %s184, 15
          %s187 = smul.addr %s186, 8
          %s188 = scalar_lea.vmem %s1, %s187
          %s189 = smul.u32 16, %s25
        $region16: #{tpu_custom_call.1} parent=11 // pred_fallthru
          _
        // Predicated region
        $region17: #{tpu_custom_call.1} parent=11 // pred_check
          %p190 = pneg %p112
        $region18: #{tpu_custom_call.1} parent=11 // pred_check_branch
          %192 = sbr.rel (%p190) target = $region20
        $region19: #{tpu_custom_call.1} parent=11 // pred_region
          %p193 = scmp.lt.s32.totalorder %s24, 0
          %s194 = scalar_select %p193, %s24, 0
          %s195 = smul.addr %s194, 8
          %s196 = scalar_lea.vmem %s2, %s195
        $region20: #{tpu_custom_call.1} parent=11 // pred_fallthru
          _
        // Predicated region
        $region21: #{tpu_custom_call.1} parent=11 // pred_check
          %p197 = pneg %p138
        $region22: #{tpu_custom_call.1} parent=11 // pred_check_branch
          %199 = sbr.rel (%p197) target = $region24
        $region23: #{tpu_custom_call.1} parent=11 // pred_region
          %p200 = scmp.lt.s32.totalorder %s24, 0
          %s201 = scalar_select %p200, %s24, 0
          %s202 = scalar_lea.vmem %s3, %s201
        $region24: #{tpu_custom_call.1} parent=11 // pred_fallthru
          _
      $region12: #{tpu_custom_call.1} parent=5 // pred_fallthru
        _
      %p203 = scmp.lt.s32.totalorder %s13, 2
      // Predicated region
      $region25: #{tpu_custom_call.1} parent=5 // pred_check
        %p204 = pneg %p203
      $region26: #{tpu_custom_call.1} parent=5 // pred_check_branch
        %206 = sbr.rel (%p204) target = $region28
      $region27: #{tpu_custom_call.1} parent=5 // pred_region
        // Predicated region
        $region29: #{tpu_custom_call.1} parent=27 // pred_check
          %p207 = pneg %p54
        $region30: #{tpu_custom_call.1} parent=27 // pred_check_branch
          %209 = sbr.rel (%p207) target = $region32
        $region31: #{tpu_custom_call.1} parent=27 // pred_region
          %s210 = smul.u32 4, %s20
          %p211 = scmp.lt.s32.totalorder %s210, 7
          %s212 = scalar_select %p211, %s210, 7
          %p213 = scmp.lt.s32.totalorder %s22, 0
          %s214 = scalar_select %p213, %s22, 0
          %s215 = sadd.s32 %s214, %s212
          %s216 = smul.addr %s215, 8
          %s217 = scalar_lea.vmem %s0, %s216
          %s218 = smul.u32 4, %s20
        $region32: #{tpu_custom_call.1} parent=27 // pred_fallthru
          _
      $region28: #{tpu_custom_call.1} parent=5 // pred_fallthru
        _
      %p219 = scmp.le.s32.totalorder 1, %s13
      %p220 = scmp.lt.s32.totalorder %s13, 3
      %p221 = pnand %p219, %p220
      %p222 = pneg %p221
      // Predicated region
      $region33: #{tpu_custom_call.1} parent=5 // pred_check
        _
      $region34: #{tpu_custom_call.1} parent=5 // pred_check_branch
        %224 = sbr.rel (%p221) target = $region36
      $region35: #{tpu_custom_call.1} parent=5 // pred_region
        %s225 = ssub.s32 %s13, 1
        %s226 = smul.u32 4, %s23
        %p227 = scmp.lt.s32.totalorder %s226, 7
        %s228 = scalar_select %p227, %s226, 7
        %p229 = scmp.lt.s32.totalorder %s25, 0
        %s230 = scalar_select %p229, %s25, 0
        %s231 = sadd.s32 %s230, %s228
        %s232 = smul.addr %s231, 8
        %s233 = scalar_lea.vmem %s0, %s232
        %p234 = pneg %p60
        %p235 = pneg %p57
        %s236 = smul.u32 16, %s25
        %p237 = scmp.lt.s32.totalorder %s236, 15
        %s238 = scalar_select %p237, %s236, 15
        %s239 = smul.addr %s238, 8
        %s240 = scalar_lea.vmem %s1, %s239
        %p241 = pneg %p86
        %p242 = pneg %p83
        %p243 = scmp.lt.s32.totalorder %s24, 0
        %s244 = scalar_select %p243, %s24, 0
        %s245 = smul.addr %s244, 8
        %s246 = scalar_lea.vmem %s2, %s245
        %p247 = pneg %p112
        %p248 = pneg %p109
        %p249 = scmp.lt.s32.totalorder %s24, 0
        %s250 = scalar_select %p249, %s24, 0
        %s251 = scalar_lea.vmem %s3, %s250
        %p252 = pneg %p138
        %p253 = pneg %p135
        %p254 = pneg %p166
        %p255 = pneg %p163
        %s256 = sand.u32 %s153, 1
        %s257 = scalar_lea.sflag [#allocation3], %s256
        %s258 = sand.u32 %s153, 1
        %s259 = smul.addr %s258, 32
        %s260 = scalar_lea.vmem [#allocation2], %s259
        %s261 = smul.u32 4, %s23
        %p262 = scmp.lt.s32.totalorder %s261, 7
        %s263 = scalar_select %p262, %s261, 7
        %p264 = scmp.lt.s32.totalorder %s25, 0
        %s265 = scalar_select %p264, %s25, 0
        %s266 = sadd.s32 %s265, %s263
        %s267 = smul.addr %s266, 8
        %s268 = scalar_lea.vmem %s0, %s267
        %s269 = smul.u32 4, %s23
        %s270 = smul.u32 16, %s25
        %p271 = scmp.lt.s32.totalorder %s270, 15
        %s272 = scalar_select %p271, %s270, 15
        %s273 = smul.addr %s272, 8
        %s274 = scalar_lea.vmem %s1, %s273
        %s275 = smul.u32 16, %s25
        %p276 = scmp.lt.s32.totalorder %s24, 0
        %s277 = scalar_select %p276, %s24, 0
        %s278 = smul.addr %s277, 8
        %s279 = scalar_lea.vmem %s2, %s278
        %p280 = scmp.lt.s32.totalorder %s24, 0
        %s281 = scalar_select %p280, %s24, 0
        %s282 = scalar_lea.vmem %s3, %s281
        %s283 = smul.u32 4, %s23
        %p284 = scmp.eq.s32.totalorder %s25, 0
        // Predicated region
        $region37: #{tpu_custom_call.1} parent=35 // pred_check
          %p285 = pneg %p284
        $region38: #{tpu_custom_call.1} parent=35 // pred_check_branch
          %287 = sbr.rel (%p285) target = $region40
        $region39: #{tpu_custom_call.1} parent=35 // pred_region
          %288 = vst [vmem:[%s260] sm:$0xff] 0.0
          %289 = vst [vmem:[%s260 + $0x8] sm:$0xff] 0.0
          %290 = vst [vmem:[%s260 + $0x10] sm:$0xff] 0.0
          %291 = vst [vmem:[%s260 + $0x18] sm:$0xff] 0.0
        $region40: #{tpu_custom_call.1} parent=35 // pred_fallthru
          _
        %v292 = vld [vmem:[%s268] sm:$0xff]
        %v293 = vld [vmem:[%s268 + $0x8] sm:$0xff]
        %v294 = vld [vmem:[%s268 + $0x10] sm:$0xff]
        %v295 = vld [vmem:[%s268 + $0x18] sm:$0xff]
        %v296 = vlaneseq
        %v297 = vand.u32 %v296, 127
        %s298 = smul.u32 %s25, 128
        %s299 = ssub.s32 64, %s298
        %v300 = vstv %s299
        %vm301 = vcmp.lt.s32.totalorder %v297, %v300
        %v302 = vsel %vm301, %v292, 0.0
        %v303 = vsel %vm301, %v293, 0.0
        %v304 = vsel %vm301, %v294, 0.0
        %v305 = vsel %vm301, %v295, 0.0
        %v306 = vld [vmem:[%s274] sm:$0xff]
        %v307 = vld [vmem:[%s274 + $0x8] sm:$0xff]
        %v308 = vld [vmem:[%s274 + $0x10] sm:$0xff]
        %v309 = vld [vmem:[%s274 + $0x18] sm:$0xff]
        %v310 = vld [vmem:[%s274 + $0x20] sm:$0xff]
        %v311 = vld [vmem:[%s274 + $0x28] sm:$0xff]
        %v312 = vld [vmem:[%s274 + $0x30] sm:$0xff]
        %v313 = vld [vmem:[%s274 + $0x38] sm:$0xff]
        %v314 = vld [vmem:[%s274 + $0x40] sm:$0xff]
        %v315 = vld [vmem:[%s274 + $0x48] sm:$0xff]
        %v316 = vld [vmem:[%s274 + $0x50] sm:$0xff]
        %v317 = vld [vmem:[%s274 + $0x58] sm:$0xff]
        %v318 = vld [vmem:[%s274 + $0x60] sm:$0xff]
        %v319 = vld [vmem:[%s274 + $0x68] sm:$0xff]
        %v320 = vld [vmem:[%s274 + $0x70] sm:$0xff]
        %v321 = vld [vmem:[%s274 + $0x78] sm:$0xff]
        %v322 = vld [vmem:[%s279] sm:$0xff]
        %v323 = vld [vmem:[%s279 + $0x8] sm:$0xff]
        %v324 = vld [vmem:[%s279 + $0x10] sm:$0xff]
        %v325 = vld [vmem:[%s279 + $0x18] sm:$0xff]
        %vm326 = vcmask 261120
        %v328 = vsel %vm326, %v306, 0
        %v331 = vsel %vm326, %v307, 0
        %v334 = vsel %vm326, %v308, 0
        %v337 = vsel %vm326, %v309, 0
        %v340 = vsel %vm326, %v310, 0
        %v343 = vsel %vm326, %v311, 0
        %v346 = vsel %vm326, %v312, 0
        %v349 = vsel %vm326, %v313, 0
        %v352 = vsel %vm326, %v314, 0
        %v355 = vsel %vm326, %v315, 0
        %v358 = vsel %vm326, %v316, 0
        %v361 = vsel %vm326, %v317, 0
        %v364 = vsel %vm326, %v318, 0
        %v367 = vsel %vm326, %v319, 0
        %v370 = vsel %vm326, %v320, 0
        %v373 = vsel %vm326, %v321, 0
        %375 = vmatprep.subr.mxu0 0.0
        %376 = vmatpush1.msra.mxu0 0.0
        %377 = vmatprep.subr.mxu0 0.0
        %378 = vmatpush1.msra.mxu0 0.0
        %379 = vmatprep.subr.mxu0 0.0
        %380 = vmatpush1.msra.mxu0 0.0
        %381 = vmatprep.subr.mxu0 0.0
        %382 = vmatpush1.msra.mxu0 0.0
        %383 = vmatprep.subr.mxu0 0.0
        %384 = vmatpush1.msra.mxu0 0.0
        %385 = vmatprep.subr.mxu0 0.0
        %386 = vmatpush1.msra.mxu0 0.0
        %387 = vmatprep.subr.mxu0 0.0
        %388 = vmatpush1.msra.mxu0 0.0
        %389 = vmatprep.subr.mxu0 0.0
        %390 = vmatpush1.msra.mxu0 0.0
        %391 = vmatprep.subr.mxu0 0.0
        %392 = vmatpush1.msra.mxu0 0.0
        %393 = vmatprep.subr.mxu0 0.0
        %394 = vmatpush1.msra.mxu0 0.0
        %395 = vmatprep.subr.mxu0 0.0
        %396 = vmatpush1.msra.mxu0 0.0
        %397 = vmatprep.subr.mxu0 0.0
        %398 = vmatpush1.msra.mxu0 0.0
        %399 = vmatprep.subr.mxu0 0.0
        %400 = vmatpush1.msra.mxu0 %v325
        %401 = vmatprep.subr.mxu0 0.0
        %402 = vmatpush1.msra.mxu0 %v324
        %403 = vmatprep.subr.mxu0 0.0
        %404 = vmatpush1.msra.mxu0 %v323
        %405 = vmatprep.subr.mxu0 0.0
        %406 = vmatpush1.msra.mxu0 %v322
        %407 = vmatprep.subr.mxu0 0.0
        %408 = vmatpush2.msra.mxu0 0.0
        %409 = vmatprep.subr.mxu0 0.0
        %410 = vmatpush2.msra.mxu0 0.0
        %411 = vmatprep.subr.mxu0 0.0
        %412 = vmatpush2.msra.mxu0 0.0
        %413 = vmatprep.subr.mxu0 0.0
        %414 = vmatpush2.msra.mxu0 0.0
        %415 = vmatprep.subr.mxu0 0.0
        %416 = vmatpush2.msra.mxu0 0.0
        %417 = vmatprep.subr.mxu0 0.0
        %418 = vmatpush2.msra.mxu0 0.0
        %419 = vmatprep.subr.mxu0 0.0
        %420 = vmatpush2.msra.mxu0 0.0
        %421 = vmatprep.subr.mxu0 0.0
        %422 = vmatpush2.msra.mxu0 0.0
        %423 = vmatprep.subr.mxu0 0.0
        %424 = vmatpush2.msra.mxu0 0.0
        %425 = vmatprep.subr.mxu0 0.0
        %426 = vmatpush2.msra.mxu0 0.0
        %427 = vmatprep.subr.mxu0 0.0
        %428 = vmatpush2.msra.mxu0 0.0
        %429 = vmatprep.subr.mxu0 0.0
        %430 = vmatpush2.msra.mxu0 0.0
        %431 = vmatprep.subr.mxu0 0.0
        %432 = vmatpush2.msra.mxu0 0.0
        %433 = vmatprep.subr.mxu0 0.0
        %434 = vmatpush2.msra.mxu0 0.0
        %435 = vmatprep.subr.mxu0 0.0
        %436 = vmatpush2.msra.mxu0 0.0
        %437 = vmatprep.subr.mxu0 0.0
        %438 = vmatpush2.msra.mxu0 0.0
        %439 = vmatprep.mubr.f32.mxu0 0.0
        %440 = vmatmul.mubr.f32.gmra.mxu0 %v328
        %v441 = vpop.f32.mrf.mxu0
        %v442 = vadd.f32 0.0, %v441
        %v443 = vpop.f32.mrf.mxu0
        %444 = vmatprep.mubr.f32.mxu0 0.0
        %445 = vmatmul.mubr.f32.gmra.mxu0 %v331
        %v446 = vpop.f32.mrf.mxu0
        %v447 = vadd.f32 0.0, %v446
        %v448 = vpop.f32.mrf.mxu0
        %449 = vmatprep.mubr.f32.mxu0 0.0
        %450 = vmatmul.mubr.f32.gmra.mxu0 %v334
        %v451 = vpop.f32.mrf.mxu0
        %v452 = vadd.f32 0.0, %v451
        %v453 = vpop.f32.mrf.mxu0
        %454 = vmatprep.mubr.f32.mxu0 0.0
        %455 = vmatmul.mubr.f32.gmra.mxu0 %v337
        %v456 = vpop.f32.mrf.mxu0
        %v457 = vadd.f32 0.0, %v456
        %v458 = vpop.f32.mrf.mxu0
        %459 = vmatprep.mubr.f32.mxu0 0.0
        %460 = vmatmul.mubr.f32.gmra.mxu0 %v340
        %v461 = vpop.f32.mrf.mxu0
        %v462 = vadd.f32 0.0, %v461
        %v463 = vpop.f32.mrf.mxu0
        %464 = vmatprep.mubr.f32.mxu0 0.0
        %465 = vmatmul.mubr.f32.gmra.mxu0 %v343
        %v466 = vpop.f32.mrf.mxu0
        %v467 = vadd.f32 0.0, %v466
        %v468 = vpop.f32.mrf.mxu0
        %469 = vmatprep.mubr.f32.mxu0 0.0
        %470 = vmatmul.mubr.f32.gmra.mxu0 %v346
        %v471 = vpop.f32.mrf.mxu0
        %v472 = vadd.f32 0.0, %v471
        %v473 = vpop.f32.mrf.mxu0
        %474 = vmatprep.mubr.f32.mxu0 0.0
        %475 = vmatmul.mubr.f32.gmra.mxu0 %v349
        %v476 = vpop.f32.mrf.mxu0
        %v477 = vadd.f32 0.0, %v476
        %v478 = vpop.f32.mrf.mxu0
        %479 = vmatprep.mubr.f32.mxu0 0.0
        %480 = vmatmul.mubr.f32.gmra.mxu0 %v352
        %v481 = vpop.f32.mrf.mxu0
        %v482 = vadd.f32 0.0, %v481
        %v483 = vpop.f32.mrf.mxu0
        %484 = vmatprep.mubr.f32.mxu0 0.0
        %485 = vmatmul.mubr.f32.gmra.mxu0 %v355
        %v486 = vpop.f32.mrf.mxu0
        %v487 = vadd.f32 0.0, %v486
        %v488 = vpop.f32.mrf.mxu0
        %489 = vmatprep.mubr.f32.mxu0 0.0
        %490 = vmatmul.mubr.f32.gmra.mxu0 %v358
        %v491 = vpop.f32.mrf.mxu0
        %v492 = vadd.f32 0.0, %v491
        %v493 = vpop.f32.mrf.mxu0
        %494 = vmatprep.mubr.f32.mxu0 0.0
        %495 = vmatmul.mubr.f32.gmra.mxu0 %v361
        %v496 = vpop.f32.mrf.mxu0
        %v497 = vadd.f32 0.0, %v496
        %v498 = vpop.f32.mrf.mxu0
        %499 = vmatprep.mubr.f32.mxu0 0.0
        %500 = vmatmul.mubr.f32.gmra.mxu0 %v364
        %v501 = vpop.f32.mrf.mxu0
        %v502 = vadd.f32 0.0, %v501
        %v503 = vpop.f32.mrf.mxu0
        %504 = vmatprep.mubr.f32.mxu0 0.0
        %505 = vmatmul.mubr.f32.gmra.mxu0 %v367
        %v506 = vpop.f32.mrf.mxu0
        %v507 = vadd.f32 0.0, %v506
        %v508 = vpop.f32.mrf.mxu0
        %509 = vmatprep.mubr.f32.mxu0 0.0
        %510 = vmatmul.mubr.f32.gmra.mxu0 %v370
        %v511 = vpop.f32.mrf.mxu0
        %v512 = vadd.f32 0.0, %v511
        %v513 = vpop.f32.mrf.mxu0
        %514 = vmatprep.mubr.f32.mxu0 0.0
        %515 = vmatmul.mubr.f32.gmra.mxu0 %v373
        %v516 = vpop.f32.mrf.mxu0
        %v517 = vadd.f32 0.0, %v516
        %v518 = vpop.f32.mrf.mxu0
        %519 = vdwg.mxu0
        %v520 = vld [vmem:[%s260] sm:$0xff]
        %v521 = vld [vmem:[%s260 + $0x8] sm:$0xff]
        %v522 = vld [vmem:[%s260 + $0x10] sm:$0xff]
        %v523 = vld [vmem:[%s260 + $0x18] sm:$0xff]
        %524 = vmatprep.subr.mxu0 0.0
        %525 = vmatpush1.msra.mxu0 %v517
        %526 = vmatprep.subr.mxu0 0.0
        %527 = vmatpush1.msra.mxu0 %v512
        %528 = vmatprep.subr.mxu0 0.0
        %529 = vmatpush1.msra.mxu0 %v507
        %530 = vmatprep.subr.mxu0 0.0
        %531 = vmatpush1.msra.mxu0 %v502
        %532 = vmatprep.subr.mxu0 0.0
        %533 = vmatpush1.msra.mxu0 %v497
        %534 = vmatprep.subr.mxu0 0.0
        %535 = vmatpush1.msra.mxu0 %v492
        %536 = vmatprep.subr.mxu0 0.0
        %537 = vmatpush1.msra.mxu0 %v487
        %538 = vmatprep.subr.mxu0 0.0
        %539 = vmatpush1.msra.mxu0 %v482
        %540 = vmatprep.subr.mxu0 0.0
        %541 = vmatpush1.msra.mxu0 %v477
        %542 = vmatprep.subr.mxu0 0.0
        %543 = vmatpush1.msra.mxu0 %v472
        %544 = vmatprep.subr.mxu0 0.0
        %545 = vmatpush1.msra.mxu0 %v467
        %546 = vmatprep.subr.mxu0 0.0
        %547 = vmatpush1.msra.mxu0 %v462
        %548 = vmatprep.subr.mxu0 0.0
        %549 = vmatpush1.msra.mxu0 %v457
        %550 = vmatprep.subr.mxu0 0.0
        %551 = vmatpush1.msra.mxu0 %v452
        %552 = vmatprep.subr.mxu0 0.0
        %553 = vmatpush1.msra.mxu0 %v447
        %554 = vmatprep.subr.mxu0 0.0
        %555 = vmatpush1.msra.mxu0 %v442
        %556 = vmatprep.subr.mxu0 0.0
        %557 = vmatpush2.msra.mxu0 0.0
        %558 = vmatprep.subr.mxu0 0.0
        %559 = vmatpush2.msra.mxu0 0.0
        %560 = vmatprep.subr.mxu0 0.0
        %561 = vmatpush2.msra.mxu0 0.0
        %562 = vmatprep.subr.mxu0 0.0
        %563 = vmatpush2.msra.mxu0 0.0
        %564 = vmatprep.subr.mxu0 0.0
        %565 = vmatpush2.msra.mxu0 0.0
        %566 = vmatprep.subr.mxu0 0.0
        %567 = vmatpush2.msra.mxu0 0.0
        %568 = vmatprep.subr.mxu0 0.0
        %569 = vmatpush2.msra.mxu0 0.0
        %570 = vmatprep.subr.mxu0 0.0
        %571 = vmatpush2.msra.mxu0 0.0
        %572 = vmatprep.subr.mxu0 0.0
        %573 = vmatpush2.msra.mxu0 0.0
        %574 = vmatprep.subr.mxu0 0.0
        %575 = vmatpush2.msra.mxu0 0.0
        %576 = vmatprep.subr.mxu0 0.0
        %577 = vmatpush2.msra.mxu0 0.0
        %578 = vmatprep.subr.mxu0 0.0
        %579 = vmatpush2.msra.mxu0 0.0
        %580 = vmatprep.subr.mxu0 0.0
        %581 = vmatpush2.msra.mxu0 0.0
        %582 = vmatprep.subr.mxu0 0.0
        %583 = vmatpush2.msra.mxu0 0.0
        %584 = vmatprep.subr.mxu0 0.0
        %585 = vmatpush2.msra.mxu0 0.0
        %586 = vmatprep.subr.mxu0 0.0
        %587 = vmatpush2.msra.mxu0 0.0
        %588 = vmatprep.mubr.f32.mxu0 0.0
        %589 = vmatmul.mubr.f32.gmra.mxu0 %v302
        %v590 = vpop.f32.mrf.mxu0
        %v591 = vadd.f32 0.0, %v590
        %v592 = vpop.f32.mrf.mxu0
        %593 = vmatprep.mubr.f32.mxu0 0.0
        %594 = vmatmul.mubr.f32.gmra.mxu0 %v303
        %v595 = vpop.f32.mrf.mxu0
        %v596 = vadd.f32 0.0, %v595
        %v597 = vpop.f32.mrf.mxu0
        %598 = vmatprep.mubr.f32.mxu0 0.0
        %599 = vmatmul.mubr.f32.gmra.mxu0 %v304
        %v600 = vpop.f32.mrf.mxu0
        %v601 = vadd.f32 0.0, %v600
        %v602 = vpop.f32.mrf.mxu0
        %603 = vmatprep.mubr.f32.mxu0 0.0
        %604 = vmatmul.mubr.f32.gmra.mxu0 %v305
        %v605 = vpop.f32.mrf.mxu0
        %v606 = vadd.f32 0.0, %v605
        %v607 = vpop.f32.mrf.mxu0
        %608 = vdwg.mxu0
        %v609 = vadd.f32 %v520, %v591
        %v610 = vadd.f32 %v521, %v596
        %v611 = vadd.f32 %v522, %v601
        %v612 = vadd.f32 %v523, %v606
        %613 = vst [vmem:[%s260] sm:$0xff] %v609
        %614 = vst [vmem:[%s260 + $0x8] sm:$0xff] %v610
        %615 = vst [vmem:[%s260 + $0x10] sm:$0xff] %v611
        %616 = vst [vmem:[%s260 + $0x18] sm:$0xff] %v612
        // Predicated region
        $region41: #{tpu_custom_call.1} parent=35 // pred_check
          %p617 = pneg %p284
        $region42: #{tpu_custom_call.1} parent=35 // pred_check_branch
          %619 = sbr.rel (%p617) target = $region44
        $region43: #{tpu_custom_call.1} parent=35 // pred_region
          %v620 = vld [vmem:[%s260] sm:$0xff]
          %v621 = vld [vmem:[%s260 + $0x8] sm:$0xff]
          %v622 = vld [vmem:[%s260 + $0x10] sm:$0xff]
          %v623 = vld [vmem:[%s260 + $0x18] sm:$0xff]
          %v624 = vld [vmem:[%s282] sm:$0x1]
          %v626 = vlaneseq
          %v627 = vshrl.u32 %v626, 7
          %v628 = vsub.s32 0, %v627
          %v629 = vrot.slane %v624, %v628
          %v631 = vadd.f32 %v620, %v629
          %v632 = vadd.f32 %v621, %v629
          %v633 = vadd.f32 %v622, %v629
          %v634 = vadd.f32 %v623, %v629
          %635 = vst [vmem:[%s260] sm:$0xff] %v631
          %636 = vst [vmem:[%s260 + $0x8] sm:$0xff] %v632
          %637 = vst [vmem:[%s260 + $0x10] sm:$0xff] %v633
          %638 = vst [vmem:[%s260 + $0x18] sm:$0xff] %v634
        $region44: #{tpu_custom_call.1} parent=35 // pred_fallthru
          _
        %s639 = sand.u32 %s153, 1
        %s640 = scalar_lea.sflag [#allocation3], %s639
        %s641 = sand.u32 %s153, 1
        %s642 = smul.addr %s641, 32
        %s643 = scalar_lea.vmem [#allocation2], %s642
        // Predicated region
        $region45: #{tpu_custom_call.1} parent=35 // pred_check
          %p644 = pneg %p163
        $region46: #{tpu_custom_call.1} parent=35 // pred_check_branch
          %646 = sbr.rel (%p644) target = $region48
        $region47: #{tpu_custom_call.1} parent=35 // pred_region
          %s647 = smul.u32 4, %s23
          %s649 = ssub.s32 512, 512
          %650 = vsyncadd %s640, %s649
          %s651 = sadd.s32 %s24, %s647
          %s652 = smul.addr %s651, 128
          %s653 = scalar_lea.hbm %s4, %s652
          %s654 = sshll.u32 %s643, 4
          %s655 = int_to_ptr.vmem [resolvable:$true] %s654
          %660 = dma.vmem_to_hbm [thread:$0]  %s655, 512, %s653, %s640, 128, 128, 8
        $region48: #{tpu_custom_call.1} parent=35 // pred_fallthru
          _
      $region36: #{tpu_custom_call.1} parent=5 // pred_fallthru
        _
      %p661 = scmp.le.s32.totalorder 2, %s13
      // Predicated region
      $region49: #{tpu_custom_call.1} parent=5 // pred_check
        %p662 = pneg %p661
      $region50: #{tpu_custom_call.1} parent=5 // pred_check_branch
        %664 = sbr.rel (%p662) target = $region52
      $region51: #{tpu_custom_call.1} parent=5 // pred_region
        %s665 = ssub.s32 %s13, 2
        // Predicated region
        $region53: #{tpu_custom_call.1} parent=51 // pred_check
          %p666 = pneg %p169
        $region54: #{tpu_custom_call.1} parent=51 // pred_check_branch
          %668 = sbr.rel (%p666) target = $region56
        $region55: #{tpu_custom_call.1} parent=51 // pred_region
          %s669 = sand.u32 %s154, 1
          %s670 = scalar_lea.sflag [#allocation3], %s669
          %s671 = sand.u32 %s154, 1
          %s672 = smul.addr %s671, 32
          %s673 = scalar_lea.vmem [#allocation2], %s672
          %674 = dma.done %s670, 512
        $region56: #{tpu_custom_call.1} parent=51 // pred_fallthru
          _
      $region52: #{tpu_custom_call.1} parent=5 // pred_fallthru
        _
    $region6: #{tpu_custom_call.1} parent=1 // loop_footer
      %s17 = sadd.s32 1, %s13
    $region7: #{tpu_custom_call.1} parent=1 // loop_footer_branch
      %12 = sbr.rel target = $region3
    $region8: #{tpu_custom_call.1} parent=1 // loop_exit
      _
    %675 = vsyncpa [#allocation3], 1
    %s676 = scalar_lea.sflag [#allocation3], 1
    %677 = vsyncpa %s676, 1

</llo_original>
